<compile_context>
chip_gen: v5e
topology: v5e:2x2
jax: 0.10.0
libtpu: 0.0.40
codegen_flags: <defaults>
</compile_context>

<pallas_src>
import jax
import jax.numpy as jnp
import numpy as np
from jax import lax
from jax.experimental import pallas as pl
from jax.experimental.pallas import tpu as pltpu


def _round_up(x, m):
    return (x + m - 1) // m * m


def ge2e_softmax_kernel(w_ref, b_ref, y_ref, counts_ref, emb_ref, loss_ref):
    """Whole-batch GE2E softmax loss.

    w_ref, b_ref : (1, 1) f32 SMEM scalars
    y_ref        : (Np, 1) i32 labels; padded rows carry -1
    counts_ref   : (1, Cp) f32 per-class sample counts (padded classes = 0)
    emb_ref      : (Np, Dp) f32 embeddings, zero-padded
    loss_ref     : (1, 1) f32 SMEM scalar output
    """
    w = w_ref[0, 0]
    b = b_ref[0, 0]

    emb = emb_ref[...]                                     # (Np, Dp) f32
    y_col = y_ref[...]                                     # (Np, 1) i32
    c_pad = counts_ref.shape[1]

    # --- one-hot mask from a (1, Cp) lane iota; no (Np, Cp) int temp ---------
    lane_iota = lax.broadcasted_iota(jnp.int32, (1, c_pad), 1)     # (1, Cp)
    mask = y_col == lane_iota                                      # (Np, Cp) bool
    row_valid = y_col >= 0                                         # (Np, 1) bool

    # --- F.normalize(emb, p=2, dim=1): e = emb * rsqrt(||emb||^2) (EUP) ------
    row_norm2 = jnp.sum(emb * emb, axis=1, keepdims=True)          # (Np, 1)
    e = emb * lax.rsqrt(jnp.maximum(row_norm2, 1e-24))             # (Np, Dp); ||e_i||==1, padded rows 0

    # --- MXU matmuls with bf16 operands, f32 accumulation --------------------
    e_bf = e.astype(jnp.bfloat16)
    oh_bf = mask.astype(jnp.bfloat16)                              # exact in bf16

    # centroids[k] = sum_{y_i==k} e_i  (transposed-LHS contraction, no ohT temp)
    centroids = lax.dot_general(
        oh_bf, e_bf, (((0,), (0,)), ((), ())),
        preferred_element_type=jnp.float32)                        # (Cp, Dp) f32
    # dots[i,k] = e_i . centroid_k  (transpose_rhs)
    dots = lax.dot_general(
        e_bf, centroids.astype(jnp.bfloat16), (((1,), (1,)), ((), ())),
        preferred_element_type=jnp.float32)                        # (Np, Cp) f32

    # ||c_k||^2 = sum_{y_i==k} dots[i,k];  dots[i, y_i] = e_i . c_{y_i}
    ohdots = jnp.where(mask, dots, 0.0)                            # (Np, Cp)
    cn2 = jnp.sum(ohdots, axis=0, keepdims=True)                   # (1, Cp)
    d_own = jnp.sum(ohdots, axis=1, keepdims=True)                 # (Np, 1)
    cn2_own = jnp.sum(jnp.where(mask, cn2, 0.0), axis=1, keepdims=True)   # (Np, 1)

    eps2 = jnp.float32(1e-16)   # (F.cosine_similarity eps)^2; ||e_i|| == 1 already

    # w folded into the scale vectors; own-class rsqrt is only (Np, 1) work.
    scale_other = w * lax.rsqrt(jnp.maximum(cn2, eps2))            # (1, Cp)
    v2_own = cn2_own - 2.0 * d_own + 1.0                           # ||c_{y_i} - e_i||^2
    own = (d_own - 1.0) * (w * lax.rsqrt(jnp.maximum(v2_own, eps2)))   # (Np, 1)

    sim = jnp.where(mask, own, dots * scale_other) + b             # (Np, Cp)
    # padded rows must not contribute to the per-column softmax denominators
    sim = jnp.where(row_valid, sim, jnp.float32(-1e30))

    # column-wise logsumexp (log_softmax over the batch axis, dim=0)
    m = jnp.max(sim, axis=0, keepdims=True)                        # (1, Cp)
    lse = jnp.log(jnp.sum(jnp.exp(sim - m), axis=0, keepdims=True)) + m   # (1, Cp)

    # loss = sum_j (lse[y_j] - Sim[j, y_j]) = sum_k n_k*lse[k] - sum_j Sim[j, y_j]
    sum_own = jnp.sum(jnp.where(row_valid, own + b, 0.0))          # scalar
    loss_ref[0, 0] = jnp.sum(counts_ref[...] * lse) - sum_own


def ge2e_loss_pallas(emb, y, num_classes, init_w=10.0, init_b=-5.0):
    """GE2E softmax loss. emb: (N, D) f32, y: (N,) int labels in [0, num_classes)."""
    emb = jnp.asarray(emb, jnp.float32)
    y = jnp.asarray(y, jnp.int32)
    n, d = emb.shape

    # lane/sublane-friendly padding (zeros for emb; -1 labels mark padded rows)
    n_pad = _round_up(max(n, 8), 8)
    d_pad = _round_up(max(d, 128), 128)
    c_pad = _round_up(max(num_classes, 128), 128)

    emb_p = jnp.zeros((n_pad, d_pad), jnp.float32).at[:n, :d].set(emb)
    y_col = jnp.full((n_pad, 1), -1, jnp.int32).at[:n, 0].set(y)
    counts = jnp.zeros((1, c_pad), jnp.float32).at[0, y].add(1.0)   # n_k per class

    w_arr = jnp.full((1, 1), init_w, jnp.float32)
    b_arr = jnp.full((1, 1), init_b, jnp.float32)

    # VMEM budget: emb/e (+bf16 copies), centroids, a handful of (Np,Cp) temps.
    vmem_bytes = 4 * (3 * n_pad * d_pad + 2 * c_pad * d_pad + 8 * n_pad * c_pad) + (1 << 20)
    vmem_limit = int(min(max(vmem_bytes, 32 << 20), 64 << 20))

    out = pl.pallas_call(
        ge2e_softmax_kernel,
        out_shape=jax.ShapeDtypeStruct((1, 1), jnp.float32),
        in_specs=[
            pl.BlockSpec(memory_space=pltpu.MemorySpace.SMEM),   # w
            pl.BlockSpec(memory_space=pltpu.MemorySpace.SMEM),   # b
            pl.BlockSpec(memory_space=pltpu.MemorySpace.VMEM),   # labels (Np, 1)
            pl.BlockSpec(memory_space=pltpu.MemorySpace.VMEM),   # counts (1, Cp)
            pl.BlockSpec(memory_space=pltpu.MemorySpace.VMEM),   # emb (Np, Dp)
        ],
        out_specs=pl.BlockSpec(memory_space=pltpu.MemorySpace.SMEM),
        compiler_params=pltpu.CompilerParams(vmem_limit_bytes=vmem_limit),
    )(w_arr, b_arr, y_col, counts, emb_p)
    return out[0, 0]


def _reference_ge2e(emb, y, num_classes, w=10.0, b=-5.0):
    """Literal numpy port of the PyTorch forward (softmax path) for validation."""
    emb = np.asarray(emb, np.float64)
    y = np.asarray(y)
    e = emb / np.maximum(np.linalg.norm(emb, axis=1, keepdims=True), 1e-12)
    N = e.shape[0]
    centroids = [e[y == k].sum(axis=0) for k in range(num_classes)]
    n = [int((y == k).sum()) for k in range(num_classes)]
    S = np.zeros((N, num_classes))
    for i in range(N):
        for k in range(num_classes):
            if k == y[i]:
                v = (centroids[k] - e[i]) / (n[k] - 1)
            else:
                v = centroids[k] / n[k]
            S[i, k] = np.dot(e[i], v) / (
                max(np.linalg.norm(e[i]), 1e-8) * max(np.linalg.norm(v), 1e-8))
    Sim = S * w + b
    m = Sim.max(axis=0, keepdims=True)
    logsm = Sim - (np.log(np.exp(Sim - m).sum(axis=0, keepdims=True)) + m)
    L = np.array([-logsm[j, y[j]] for j in range(N)])
    return L.sum()


if __name__ == "__main__":
    key = jax.random.PRNGKey(0)
    N, D, C = 16, 64, 4                     # 4 speakers x 4 utterances, 64-dim embeddings
    emb = jax.random.normal(key, (N, D), dtype=jnp.float32)
    y = jnp.array([0, 1, 2, 3] * 4, dtype=jnp.int32)

    loss = ge2e_loss_pallas(emb, y, num_classes=C, init_w=10.0, init_b=-5.0)
    loss = jax.block_until_ready(loss)

    ref = _reference_ge2e(np.asarray(emb), np.asarray(y), C, w=10.0, b=-5.0)
    # bf16 MXU operands (f32 accumulation) cost ~3 decimal digits vs the f64 reference.
    np.testing.assert_allclose(float(loss), float(ref), rtol=5e-3, atol=5e-3)

    print("KERNEL_OK")
</pallas_src>

<mosaic_0001>
module attributes {stable_mosaic.version = 11 : i64} {
  func.func @ge2e_softmax_kernel(%arg0: memref<1x1xf32, #tpu.memory_space<smem>>, %arg1: memref<1x1xf32, #tpu.memory_space<smem>>, %arg2: memref<16x1xi32, #tpu.memory_space<vmem>>, %arg3: memref<1x128xf32, #tpu.memory_space<vmem>>, %arg4: memref<16x128xf32, #tpu.memory_space<vmem>>, %arg5: memref<1x1xf32, #tpu.memory_space<smem>>) attributes {dimension_semantics = [], scalar_prefetch = 0 : i64, scratch_operands = 0 : i64, tpu.core_type = #tpu.core_type<tc>} {
    %c0 = arith.constant 0 : index
    %c0_0 = arith.constant 0 : index
    %0 = memref.load %arg0[%c0, %c0_0] : memref<1x1xf32, #tpu.memory_space<smem>>
    %c0_1 = arith.constant 0 : index
    %c0_2 = arith.constant 0 : index
    %1 = memref.load %arg1[%c0_1, %c0_2] : memref<1x1xf32, #tpu.memory_space<smem>>
    %c0_3 = arith.constant 0 : index
    %c0_4 = arith.constant 0 : index
    %2 = vector.load %arg4[%c0_3, %c0_4] : memref<16x128xf32, #tpu.memory_space<vmem>>, vector<16x128xf32>
    %c0_5 = arith.constant 0 : index
    %c0_6 = arith.constant 0 : index
    %3 = vector.load %arg2[%c0_5, %c0_6] : memref<16x1xi32, #tpu.memory_space<vmem>>, vector<16x1xi32>
    %4 = tpu.iota {dimensions = array<i32: 1>} : vector<1x128xi32>
    %5 = vector.broadcast %3 : vector<16x1xi32> to vector<16x128xi32>
    %6 = vector.broadcast %4 : vector<1x128xi32> to vector<16x128xi32>
    %7 = arith.cmpi eq, %5, %6 : vector<16x128xi32>
    %c0_i32 = arith.constant 0 : i32
    %8 = vector.broadcast %c0_i32 : i32 to vector<16x1xi32>
    %9 = arith.cmpi sge, %3, %8 : vector<16x1xi32>
    %10 = arith.mulf %2, %2 : vector<16x128xf32>
    %cst = arith.constant dense<0.000000e+00> : vector<16xf32>
    %11 = vector.multi_reduction <add>, %10, %cst [1] : vector<16x128xf32> to vector<16xf32>
    %12 = vector.shape_cast %11 : vector<16xf32> to vector<16x1xf32>
    %cst_7 = arith.constant 1.000000e-24 : f32
    %13 = vector.broadcast %cst_7 : f32 to vector<16x1xf32>
    %14 = arith.maximumf %12, %13 : vector<16x1xf32>
    %15 = math.rsqrt %14 : vector<16x1xf32>
    %16 = vector.broadcast %15 : vector<16x1xf32> to vector<16x128xf32>
    %17 = arith.mulf %2, %16 : vector<16x128xf32>
    %18 = arith.truncf %17 : vector<16x128xf32> to vector<16x128xbf16>
    %19 = arith.extui %7 : vector<16x128xi1> to vector<16x128xi32>
    %20 = arith.sitofp %19 : vector<16x128xi32> to vector<16x128xf32>
    %21 = arith.truncf %20 : vector<16x128xf32> to vector<16x128xbf16>
    %cst_8 = arith.constant dense<0.000000e+00> : vector<128x128xf32>
    %22 = tpu.matmul %21, %18, %cst_8 {dimension_numbers = #tpu.dot_dimension_numbers<[0], [0], [1], [1], [0, 1, 1, 1], [], []>} : vector<16x128xbf16>, vector<16x128xbf16>, vector<128x128xf32> -> vector<128x128xf32>
    %23 = arith.truncf %22 : vector<128x128xf32> to vector<128x128xbf16>
    %cst_9 = arith.constant dense<0.000000e+00> : vector<16x128xf32>
    %24 = tpu.matmul %18, %23, %cst_9 {dimension_numbers = #tpu.dot_dimension_numbers<[1], [1], [0], [0], [0, 0, 1, 0], [], []>} : vector<16x128xbf16>, vector<128x128xbf16>, vector<16x128xf32> -> vector<16x128xf32>
    %cst_10 = arith.constant 0.000000e+00 : f32
    %25 = vector.broadcast %cst_10 : f32 to vector<16x128xf32>
    %26 = arith.select %7, %24, %25 : vector<16x128xi1>, vector<16x128xf32>
    %cst_11 = arith.constant dense<0.000000e+00> : vector<128xf32>
    %27 = vector.multi_reduction <add>, %26, %cst_11 [0] : vector<16x128xf32> to vector<128xf32>
    %28 = vector.shape_cast %27 : vector<128xf32> to vector<1x128xf32>
    %cst_12 = arith.constant dense<0.000000e+00> : vector<16xf32>
    %29 = vector.multi_reduction <add>, %26, %cst_12 [1] : vector<16x128xf32> to vector<16xf32>
    %30 = vector.shape_cast %29 : vector<16xf32> to vector<16x1xf32>
    %cst_13 = arith.constant 0.000000e+00 : f32
    %31 = vector.shape_cast %28 : vector<1x128xf32> to vector<1x128xf32>
    %32 = vector.broadcast %31 : vector<1x128xf32> to vector<16x128xf32>
    %33 = vector.broadcast %cst_13 : f32 to vector<16x128xf32>
    %34 = arith.select %7, %32, %33 : vector<16x128xi1>, vector<16x128xf32>
    %cst_14 = arith.constant dense<0.000000e+00> : vector<16xf32>
    %35 = vector.multi_reduction <add>, %34, %cst_14 [1] : vector<16x128xf32> to vector<16xf32>
    %36 = vector.shape_cast %35 : vector<16xf32> to vector<16x1xf32>
    %cst_15 = arith.constant 1.000000e-16 : f32
    %37 = vector.broadcast %cst_15 : f32 to vector<1x128xf32>
    %38 = arith.maximumf %28, %37 : vector<1x128xf32>
    %39 = math.rsqrt %38 : vector<1x128xf32>
    %40 = vector.broadcast %0 : f32 to vector<1x128xf32>
    %41 = arith.mulf %40, %39 : vector<1x128xf32>
    %cst_16 = arith.constant 2.000000e+00 : f32
    %42 = vector.broadcast %cst_16 : f32 to vector<16x1xf32>
    %43 = arith.mulf %42, %30 : vector<16x1xf32>
    %44 = arith.subf %36, %43 : vector<16x1xf32>
    %cst_17 = arith.constant 1.000000e+00 : f32
    %45 = vector.broadcast %cst_17 : f32 to vector<16x1xf32>
    %46 = arith.addf %44, %45 : vector<16x1xf32>
    %cst_18 = arith.constant 1.000000e+00 : f32
    %47 = vector.broadcast %cst_18 : f32 to vector<16x1xf32>
    %48 = arith.subf %30, %47 : vector<16x1xf32>
    %cst_19 = arith.constant 1.000000e-16 : f32
    %49 = vector.broadcast %cst_19 : f32 to vector<16x1xf32>
    %50 = arith.maximumf %46, %49 : vector<16x1xf32>
    %51 = math.rsqrt %50 : vector<16x1xf32>
    %52 = vector.broadcast %0 : f32 to vector<16x1xf32>
    %53 = arith.mulf %52, %51 : vector<16x1xf32>
    %54 = arith.mulf %48, %53 : vector<16x1xf32>
    %55 = vector.broadcast %41 : vector<1x128xf32> to vector<16x128xf32>
    %56 = arith.mulf %24, %55 : vector<16x128xf32>
    %57 = vector.shape_cast %54 : vector<16x1xf32> to vector<16x1xf32>
    %58 = vector.broadcast %57 : vector<16x1xf32> to vector<16x128xf32>
    %59 = arith.select %7, %58, %56 : vector<16x128xi1>, vector<16x128xf32>
    %60 = vector.broadcast %1 : f32 to vector<16x128xf32>
    %61 = arith.addf %59, %60 : vector<16x128xf32>
    %cst_20 = arith.constant -1.000000e+30 : f32
    %62 = vector.shape_cast %9 : vector<16x1xi1> to vector<16x1xi1>
    %63 = vector.broadcast %62 : vector<16x1xi1> to vector<16x128xi1>
    %64 = vector.broadcast %cst_20 : f32 to vector<16x128xf32>
    %65 = arith.select %63, %61, %64 : vector<16x128xi1>, vector<16x128xf32>
    %cst_21 = arith.constant dense<0xFF800000> : vector<128xf32>
    %66 = vector.multi_reduction <maximumf>, %65, %cst_21 [0] : vector<16x128xf32> to vector<128xf32>
    %67 = vector.shape_cast %66 : vector<128xf32> to vector<1x128xf32>
    %68 = vector.broadcast %67 : vector<1x128xf32> to vector<16x128xf32>
    %69 = arith.subf %65, %68 : vector<16x128xf32>
    %70 = math.exp %69 : vector<16x128xf32>
    %cst_22 = arith.constant dense<0.000000e+00> : vector<128xf32>
    %71 = vector.multi_reduction <add>, %70, %cst_22 [0] : vector<16x128xf32> to vector<128xf32>
    %72 = vector.shape_cast %71 : vector<128xf32> to vector<1x128xf32>
    %73 = math.log %72 : vector<1x128xf32>
    %74 = arith.addf %73, %67 : vector<1x128xf32>
    %75 = vector.broadcast %1 : f32 to vector<16x1xf32>
    %76 = arith.addf %54, %75 : vector<16x1xf32>
    %cst_23 = arith.constant 0.000000e+00 : f32
    %77 = vector.broadcast %cst_23 : f32 to vector<16x1xf32>
    %78 = arith.select %9, %76, %77 : vector<16x1xi1>, vector<16x1xf32>
    %79 = vector.shape_cast %78 : vector<16x1xf32> to vector<1x16x1xf32>
    %cst_24 = arith.constant dense<0.000000e+00> : vector<1xf32>
    %80 = vector.multi_reduction <add>, %79, %cst_24 [1, 2] : vector<1x16x1xf32> to vector<1xf32>
    %81 = vector.shape_cast %80 : vector<1xf32> to vector<1x1x1xf32>
    %82 = vector.extract %81[0, 0, 0] : f32 from vector<1x1x1xf32>
    %c0_25 = arith.constant 0 : index
    %c0_26 = arith.constant 0 : index
    %83 = vector.load %arg3[%c0_25, %c0_26] : memref<1x128xf32, #tpu.memory_space<vmem>>, vector<1x128xf32>
    %84 = arith.mulf %83, %74 : vector<1x128xf32>
    %85 = vector.shape_cast %84 : vector<1x128xf32> to vector<1x1x128xf32>
    %cst_27 = arith.constant dense<0.000000e+00> : vector<1xf32>
    %86 = vector.multi_reduction <add>, %85, %cst_27 [1, 2] : vector<1x1x128xf32> to vector<1xf32>
    %87 = vector.shape_cast %86 : vector<1xf32> to vector<1x1x1xf32>
    %88 = vector.extract %87[0, 0, 0] : f32 from vector<1x1x1xf32>
    %89 = arith.subf %88, %82 : f32
    %c0_28 = arith.constant 0 : index
    %c0_29 = arith.constant 0 : index
    %90 = memref.load %arg5[%c0_28, %c0_29] : memref<1x1xf32, #tpu.memory_space<smem>>
    memref.store %89, %arg5[%c0_28, %c0_29] : memref<1x1xf32, #tpu.memory_space<smem>>
    return
  }
}

</mosaic_0001>

<llo_original>
// kernel: tpu_custom_call.1
$region0: #{tpu_custom_call.1}
  #allocation0 [shape = 'u32[]', space=smem, size = 0x4, offset = 0x4, fixed_abs, tag = 'smem constant byte address 0x4 - core index']
  #allocation1 [shape = 'u32[72,128]{1,0:T(1,128)}', space=vmem, size = 0x9000, scoped, tag = 'internal scratch']
  #allocation2 [shape = 'f32[1,1]{1,0:T(1,128)S(6)}', space=smem, size = 0x200, scoped, tag = 'scoped memory for tpu_custom_call.1']
  #allocation3 [shape = 'f32[1,1]{1,0:T(1,128)S(6)}', space=smem, size = 0x200, scoped, tag = 'scoped memory for tpu_custom_call.1']
  %s0 = inlined_call_operand.<no memory space> [shape: f32[1,1], index: 0, kind: input, shape index: {}]
  %s1 = inlined_call_operand.<no memory space> [shape: f32[1,1], index: 1, kind: input, shape index: {}]
  %s2 = inlined_call_operand.vmem [shape: s32[16,1], index: 2, kind: input, shape index: {}]
  %s3 = inlined_call_operand.vmem [shape: f32[1,128], index: 3, kind: input, shape index: {}]
  %s4 = inlined_call_operand.vmem [shape: f32[16,128], index: 4, kind: input, shape index: {}]
  %s5 = inlined_call_operand.hbm [shape: f32[1,1], index: 5, kind: output, shape index: {}]
  %s6 = sld [smem:[#allocation0]]
  $region30: #{tpu_custom_call.1} parent=0
    _
  %s8 = ssub.s32 1, %s6
  %s9 = scalar_select 0, %s8, %s6
  %10 = sst [smem:[#allocation2]] %s0
  %11 = sst [smem:[#allocation3]] %s1
  $region1: #{tpu_custom_call.1} parent=0
    #allocation4 [shape = 'u8[512]{0}', space=smem, size = 0x200, scoped, tag = 'output window, operand 0, single buffered']
    #allocation5 [shape = 's32[1]{0}', space=sflag, size = 0x4, scoped, tag = 'scoped memory for tpu_custom_call.1']
    %12 = vsyncpa [#allocation5], 0
    // Predicated region
    $region2: #{tpu_custom_call.1} parent=1 // pred_check
      _
    $region3: #{tpu_custom_call.1} parent=1 // pred_check_branch
      %14 = sbr.rel (0) target = $region5
    $region4: #{tpu_custom_call.1} parent=1 // pred_region
      _
    $region5: #{tpu_custom_call.1} parent=1 // pred_fallthru
      _
    // Predicated region
    $region6: #{tpu_custom_call.1} parent=1 // pred_check
      _
    $region7: #{tpu_custom_call.1} parent=1 // pred_check_branch
      %16 = sbr.rel (0) target = $region9
    $region8: #{tpu_custom_call.1} parent=1 // pred_region
      _
    $region9: #{tpu_custom_call.1} parent=1 // pred_fallthru
      _
    // Predicated region
    $region10: #{tpu_custom_call.1} parent=1 // pred_check
      _
    $region11: #{tpu_custom_call.1} parent=1 // pred_check_branch
      %18 = sbr.rel (0) target = $region13
    $region12: #{tpu_custom_call.1} parent=1 // pred_region
      _
    $region13: #{tpu_custom_call.1} parent=1 // pred_fallthru
      _
    // Predicated region
    $region14: #{tpu_custom_call.1} parent=1 // pred_check
      _
    $region15: #{tpu_custom_call.1} parent=1 // pred_check_branch
      %20 = sbr.rel (0) target = $region17
    $region16: #{tpu_custom_call.1} parent=1 // pred_region
      _
    $region17: #{tpu_custom_call.1} parent=1 // pred_fallthru
      _
    // Predicated region
    $region18: #{tpu_custom_call.1} parent=1 // pred_check
      _
    $region19: #{tpu_custom_call.1} parent=1 // pred_check_branch
      %22 = sbr.rel (0) target = $region21
    $region20: #{tpu_custom_call.1} parent=1 // pred_region
      _
    $region21: #{tpu_custom_call.1} parent=1 // pred_fallthru
      _
    %s24 = sld [smem:[#allocation2]]
    %s25 = sld [smem:[#allocation3]]
    %v26 = vld [vmem:[%s4] sm:$0xff]
    %v27 = vld [vmem:[%s4 + $0x8] sm:$0xff]
    %v28 = vld [vmem:[%s2] sm:$0xff]
    %v29 = vld [vmem:[%s2 + $0x8] sm:$0xff]
    %v30 = vlaneseq
    %v31 = vand.u32 %v30, 127
    %32 = vset.pattern.permute.xlu0 0
    %33 = vperm.xlu0 %32, %v28
    %v34 = vpop.permute.xlu0 %33
    %35 = vset.pattern.permute.xlu0 0
    %36 = vperm.xlu0 %35, %v29
    %v37 = vpop.permute.xlu0 %36
    %vm38 = vcmp.eq.s32.totalorder %v34, %v31
    %vm39 = vcmp.eq.s32.totalorder %v37, %v31
    %vm40 = vcmp.ge.s32.totalorder %v28, 0
    %vm41 = vcmp.ge.s32.totalorder %v29, 0
    %v42 = vmul.f32 %v26, %v26
    %v43 = vmul.f32 %v27, %v27
    %44 = vadd.xlane.f32.xlu0 %v42
    %v45 = vpop.xlane.xlu0 %44
    %46 = vadd.xlane.f32.xlu0 %v43
    %v47 = vpop.xlane.xlu0 %46
    %v48 = vmax.f32 %v45, 1e-24
    %v49 = vmax.f32 %v47, 1e-24
    %v50 = vrsqrt.pop %v48
    %v51 = vmul.f32 %v50, %v48
    %v52 = vmul.f32 %v51, %v50
    %v53 = vmul.f32 0.5, %v52
    %v54 = vsub.f32 1.5, %v53
    %v55 = vmul.f32 %v50, %v54
    %vm56 = vweird.f32 %v48
    %vm57 = vweird.f32 %v50
    %vm58 = vmor %vm56, %vm57
    %v59 = vsel %vm58, %v50, %v55
    %v60 = vrsqrt.pop %v49
    %v61 = vmul.f32 %v60, %v49
    %v62 = vmul.f32 %v61, %v60
    %v63 = vmul.f32 0.5, %v62
    %v64 = vsub.f32 1.5, %v63
    %v65 = vmul.f32 %v60, %v64
    %vm66 = vweird.f32 %v49
    %vm67 = vweird.f32 %v60
    %vm68 = vmor %vm66, %vm67
    %v69 = vsel %vm68, %v60, %v65
    %v70 = vmul.f32 %v26, %v59
    %v71 = vmul.f32 %v27, %v69
    %v72 = vpack.c.bf16 %v71, %v70
    %v73 = vsel %vm38, 1, 0
    %v74 = vsel %vm39, 1, 0
    %v75 = vcvt.s32.f32 %v73
    %v76 = vcvt.s32.f32 %v74
    %v77 = vpack.c.bf16 %v76, %v75
    %78 = vxpose.xlu0.c.b16.start [1/8] %v77, 128
    %79 = vxpose.xlu0.c.b16.cont [2/8] 0, 128
    %80 = vxpose.xlu0.c.b16.cont [3/8] 0, 128
    %81 = vxpose.xlu0.c.b16.cont [4/8] 0, 128
    %82 = vxpose.xlu0.c.b16.cont [5/8] 0, 128
    %83 = vxpose.xlu0.c.b16.cont [6/8] 0, 128
    %84 = vxpose.xlu0.c.b16.cont [7/8] 0, 128
    %85 = vxpose.xlu0.c.b16.end [8/8] 0, 128
    %v86 = vpop.trf.xlu0
    %v87 = vpop.trf.xlu0
    %v88 = vpop.trf.xlu0
    %v89 = vpop.trf.xlu0
    %v90 = vpop.trf.xlu0
    %v91 = vpop.trf.xlu0
    %v92 = vpop.trf.xlu0
    %v93 = vpop.trf.xlu0
    %vm94 = vcmask 130048
    %v96 = vsel %vm94, %v86, 0
    %v99 = vsel %vm94, %v87, 0
    %v102 = vsel %vm94, %v88, 0
    %v105 = vsel %vm94, %v89, 0
    %v108 = vsel %vm94, %v90, 0
    %v111 = vsel %vm94, %v91, 0
    %v114 = vsel %vm94, %v92, 0
    %v117 = vsel %vm94, %v93, 0
    %119 = vmatpush.bf16.msra.mxu0 0
    %120 = vmatpush.bf16.msra.mxu0 0
    %121 = vmatpush.bf16.msra.mxu0 0
    %122 = vmatpush.bf16.msra.mxu0 0
    %123 = vmatpush.bf16.msra.mxu0 0
    %124 = vmatpush.bf16.msra.mxu0 0
    %125 = vmatpush.bf16.msra.mxu0 0
    %126 = vmatpush.bf16.msra.mxu0 %v72
    %127 = vmatmul.bf16.gmra.mxu0 %v96
    %v128 = vpop.f32.mrf.mxu0
    %v129 = vadd.f32 0.0, %v128
    %v130 = vpop.f32.mrf.mxu0
    %v131 = vadd.f32 0.0, %v130
    %132 = vmatmul.bf16.gmra.mxu0 %v99
    %v133 = vpop.f32.mrf.mxu0
    %v134 = vadd.f32 0.0, %v133
    %v135 = vpop.f32.mrf.mxu0
    %v136 = vadd.f32 0.0, %v135
    %137 = vmatmul.bf16.gmra.mxu0 %v102
    %v138 = vpop.f32.mrf.mxu0
    %v139 = vadd.f32 0.0, %v138
    %v140 = vpop.f32.mrf.mxu0
    %v141 = vadd.f32 0.0, %v140
    %142 = vmatmul.bf16.gmra.mxu0 %v105
    %v143 = vpop.f32.mrf.mxu0
    %v144 = vadd.f32 0.0, %v143
    %v145 = vpop.f32.mrf.mxu0
    %v146 = vadd.f32 0.0, %v145
    %147 = vmatmul.bf16.gmra.mxu0 %v108
    %v148 = vpop.f32.mrf.mxu0
    %v149 = vadd.f32 0.0, %v148
    %v150 = vpop.f32.mrf.mxu0
    %v151 = vadd.f32 0.0, %v150
    %152 = vmatmul.bf16.gmra.mxu0 %v111
    %v153 = vpop.f32.mrf.mxu0
    %v154 = vadd.f32 0.0, %v153
    %v155 = vpop.f32.mrf.mxu0
    %v156 = vadd.f32 0.0, %v155
    %157 = vmatmul.bf16.gmra.mxu0 %v114
    %v158 = vpop.f32.mrf.mxu0
    %v159 = vadd.f32 0.0, %v158
    %v160 = vpop.f32.mrf.mxu0
    %v161 = vadd.f32 0.0, %v160
    %162 = vmatmul.bf16.gmra.mxu0 %v117
    %v163 = vpop.f32.mrf.mxu0
    %v164 = vadd.f32 0.0, %v163
    %v165 = vpop.f32.mrf.mxu0
    %v166 = vadd.f32 0.0, %v165
    %167 = vdwg.mxu0
    %v168 = vpack.c.bf16 %v131, %v129
    %v169 = vpack.c.bf16 %v136, %v134
    %v170 = vpack.c.bf16 %v141, %v139
    %v171 = vpack.c.bf16 %v146, %v144
    %v172 = vpack.c.bf16 %v151, %v149
    %v173 = vpack.c.bf16 %v156, %v154
    %v174 = vpack.c.bf16 %v161, %v159
    %v175 = vpack.c.bf16 %v166, %v164
    %176 = vmatpush.bf16.xpose.msra.mxu0 %v175
    %177 = vmatpush.bf16.xpose.msra.mxu0 %v174
    %178 = vmatpush.bf16.xpose.msra.mxu0 %v173
    %179 = vmatpush.bf16.xpose.msra.mxu0 %v172
    %180 = vmatpush.bf16.xpose.msra.mxu0 %v171
    %181 = vmatpush.bf16.xpose.msra.mxu0 %v170
    %182 = vmatpush.bf16.xpose.msra.mxu0 %v169
    %183 = vmatpush.bf16.xpose.msra.mxu0 %v168
    %184 = vmatmul.bf16.gmra.mxu0 %v72
    %v185 = vpop.f32.mrf.mxu0
    %v186 = vadd.f32 0.0, %v185
    %v187 = vpop.f32.mrf.mxu0
    %v188 = vadd.f32 0.0, %v187
    %189 = vdwg.mxu0
    %v190 = vsel %vm38, %v186, 0.0
    %v191 = vsel %vm39, %v188, 0.0
    %v192 = vadd.f32 %v190, %v191
    %v193 = vrot.slane %v192, 4
    %v194 = vadd.f32 %v192, %v193
    %v195 = vrot.slane %v194, 2
    %v196 = vadd.f32 %v194, %v195
    %v197 = vrot.slane %v196, 1
    %v198 = vadd.f32 %v196, %v197
    %199 = vadd.xlane.f32.xlu0 %v190
    %v200 = vpop.xlane.xlu0 %199
    %201 = vadd.xlane.f32.xlu0 %v191
    %v202 = vpop.xlane.xlu0 %201
    %v203 = vsel %vm38, %v198, 0.0
    %v204 = vsel %vm39, %v198, 0.0
    %205 = vadd.xlane.f32.xlu0 %v203
    %v206 = vpop.xlane.xlu0 %205
    %207 = vadd.xlane.f32.xlu0 %v204
    %v208 = vpop.xlane.xlu0 %207
    %v209 = vmax.f32 %v198, 1e-16
    %v210 = vrsqrt.pop %v209
    %v211 = vmul.f32 %v210, %v209
    %v212 = vmul.f32 %v211, %v210
    %v213 = vmul.f32 0.5, %v212
    %v214 = vsub.f32 1.5, %v213
    %v215 = vmul.f32 %v210, %v214
    %vm216 = vweird.f32 %v209
    %vm217 = vweird.f32 %v210
    %vm218 = vmor %vm216, %vm217
    %v219 = vsel %vm218, %v210, %v215
    %v220 = vstv %s24
    %v221 = vmul.f32 %v220, %v219
    %v222 = vmul.f32 %v200, 2.0
    %v223 = vmul.f32 %v202, 2.0
    %v224 = vsub.f32 %v206, %v222
    %v225 = vsub.f32 %v208, %v223
    %v226 = vadd.f32 %v224, 1.0
    %v227 = vadd.f32 %v225, 1.0
    %v228 = vsub.f32 %v200, 1.0
    %v229 = vsub.f32 %v202, 1.0
    %v230 = vmax.f32 %v226, 1e-16
    %v231 = vmax.f32 %v227, 1e-16
    %v232 = vrsqrt.pop %v230
    %v233 = vmul.f32 %v232, %v230
    %v234 = vmul.f32 %v233, %v232
    %v235 = vmul.f32 0.5, %v234
    %v236 = vsub.f32 1.5, %v235
    %v237 = vmul.f32 %v232, %v236
    %vm238 = vweird.f32 %v230
    %vm239 = vweird.f32 %v232
    %vm240 = vmor %vm238, %vm239
    %v241 = vsel %vm240, %v232, %v237
    %v242 = vrsqrt.pop %v231
    %v243 = vmul.f32 %v242, %v231
    %v244 = vmul.f32 %v243, %v242
    %v245 = vmul.f32 0.5, %v244
    %v246 = vsub.f32 1.5, %v245
    %v247 = vmul.f32 %v242, %v246
    %vm248 = vweird.f32 %v231
    %vm249 = vweird.f32 %v242
    %vm250 = vmor %vm248, %vm249
    %v251 = vsel %vm250, %v242, %v247
    %v252 = vmul.f32 %v220, %v241
    %v253 = vmul.f32 %v220, %v251
    %v254 = vmul.f32 %v228, %v252
    %v255 = vmul.f32 %v229, %v253
    %v256 = vmul.f32 %v186, %v221
    %v257 = vmul.f32 %v188, %v221
    %v258 = vsel %vm38, %v254, %v256
    %v259 = vsel %vm39, %v255, %v257
    %v260 = vstv %s25
    %v261 = vadd.f32 %v258, %v260
    %v262 = vadd.f32 %v259, %v260
    %v263 = vsel %vm40, 1, 0
    %v264 = vsel %vm41, 1, 0
    %265 = vset.pattern.permute.xlu0 0
    %266 = vperm.xlu0 %265, %v263
    %v267 = vpop.permute.xlu0 %266
    %268 = vset.pattern.permute.xlu0 0
    %269 = vperm.xlu0 %268, %v264
    %v270 = vpop.permute.xlu0 %269
    %vm271 = vcmp.eq.s32.totalorder %v267, 1
    %vm272 = vcmp.eq.s32.totalorder %v270, 1
    %v273 = vsel %vm271, %v261, -1e+30
    %v274 = vsel %vm272, %v262, -1e+30
    %v275 = vmax.f32 %v273, %v274
    %v276 = vrot.slane %v275, 4
    %v277 = vmax.f32 %v275, %v276
    %v278 = vrot.slane %v277, 2
    %v279 = vmax.f32 %v277, %v278
    %v280 = vrot.slane %v279, 1
    %v281 = vmax.f32 %v279, %v280
    %v282 = vsub.f32 %v273, %v281
    %v283 = vsub.f32 %v274, %v281
    %v284 = vmul.f32 %v282, 1.442695
    %v285 = vpow.pop %v284
    %v286 = vmul.f32 %v283, 1.442695
    %v287 = vpow.pop %v286
    %v288 = vadd.f32 %v285, %v287
    %v289 = vrot.slane %v288, 4
    %v290 = vadd.f32 %v288, %v289
    %v291 = vrot.slane %v290, 2
    %v292 = vadd.f32 %v290, %v291
    %v293 = vrot.slane %v292, 1
    %v294 = vadd.f32 %v292, %v293
    %v295 = vlog2.pop %v294
    %v296 = vmul.f32 %v295, 0.6931472
    %v297 = vadd.f32 %v296, %v281
    %v298 = vadd.f32 %v254, %v260
    %v299 = vadd.f32 %v255, %v260
    %v300 = vsel %vm40, %v298, 0.0
    %v301 = vsel %vm41, %v299, 0.0
    %vm302 = vcmask 7168
    %v303 = vsel %vm302, %v300, 0.0
    %v304 = vsel %vm302, %v301, 0.0
    %v305 = vadd.f32 %v303, %v304
    %306 = vadd.xlane.f32.xlu0 %v305
    %v307 = vpop.xlane.xlu0 %306
    %v308 = vrot.slane %v307, 4
    %v309 = vadd.f32 %v307, %v308
    %v310 = vrot.slane %v309, 2
    %v311 = vadd.f32 %v309, %v310
    %v312 = vrot.slane %v311, 1
    %v313 = vadd.f32 %v311, %v312
    %s314 = vtos %v313
    %v315 = vld [vmem:[%s3] sm:$0x1]
    %v316 = vmul.f32 %v315, %v297
    %vm317 = vcmask 1040384
    %v318 = vsel %vm317, %v316, 0.0
    %319 = vadd.xlane.f32.xlu0 %v318
    %v320 = vpop.xlane.xlu0 %319
    %v321 = vrot.slane %v320, 4
    %v322 = vadd.f32 %v320, %v321
    %v323 = vrot.slane %v322, 2
    %v324 = vadd.f32 %v322, %v323
    %v325 = vrot.slane %v324, 1
    %v326 = vadd.f32 %v324, %v325
    %s327 = vtos %v326
    %s328 = ssub.f32 %s327, %s314
    %s329 = scalar_lea.smem [#allocation4], 0
    %330 = sst [smem:[%s329]] %s328
    // Predicated region
    $region22: #{tpu_custom_call.1} parent=1 // pred_check
      _
    $region23: #{tpu_custom_call.1} parent=1 // pred_check_branch
      %332 = sbr.rel (0) target = $region25
    $region24: #{tpu_custom_call.1} parent=1 // pred_region
      %334 = vsyncadd [#allocation5], 0
      %s336 = sshll.u32 %s5, 4
      %s337 = int_to_ptr.hbm [resolvable:$true] %s336
      %339 = dma.smem_to_hbm [#allocation4], 16, %s337, [#allocation5]
    $region25: #{tpu_custom_call.1} parent=1 // pred_fallthru
      _
    // Predicated region
    $region26: #{tpu_custom_call.1} parent=1 // pred_check
      _
    $region27: #{tpu_custom_call.1} parent=1 // pred_check_branch
      %341 = sbr.rel (0) target = $region29
    $region28: #{tpu_custom_call.1} parent=1 // pred_region
      %343 = dma.done [#allocation5], 16
    $region29: #{tpu_custom_call.1} parent=1 // pred_fallthru
      _
    %344 = sfence
    %345 = vsyncpa [#allocation5], 1

</llo_original>
